<compile_context>
chip_gen: v7x
topology: tpu7x:2x2x1
jax: 0.10.0
libtpu: 0.0.40
codegen_flags: <defaults>
</compile_context>

<pallas_src>
import math
import functools

import jax
import jax.numpy as jnp
from jax.experimental import pallas as pl
from jax.experimental.pallas import tpu as pltpu


def _silu(x):
    return x * jax.nn.sigmoid(x)


# --------------------------------------------------------------------------
# Pallas kernel: per-(batch, seq-tile) decoder block.
# --------------------------------------------------------------------------
def decoder_kernel(temb_ref,                      # [B, H]   f32 (VMEM-resident)
                   rep_ref, xt_ref,               # [TILE_S, H] per tile
                   wd1_ref, bd1_ref,              # [H, 4H] bf16, [1, 4H] f32
                   wd2_ref, bd2_ref,              # [4H, H] bf16, [1, H]  f32
                   gamma_ref, beta_ref,           # [1, H] f32
                   out_ref,                       # [TILE_S, H]
                   *, lam, eps):
    b = pl.program_id(0)

    # ---- rep_diffu = rep_item + lambda * (x_t + time_emb) ------------------
    rep = rep_ref[...].astype(jnp.float32)                       # [TILE_S, H]
    xt = xt_ref[...].astype(jnp.float32)                         # [TILE_S, H]
    temb = temb_ref[pl.ds(b, 1), :].astype(jnp.float32)          # [1, H]
    h = rep + lam * (xt + temb)                                  # broadcast over seq

    # ---- decoder: Linear(H,4H) -> SiLU -> Linear(4H,H) ---------------------
    # bf16 operands on the MXU, f32 accumulation.
    h1 = _silu(jnp.dot(h.astype(jnp.bfloat16), wd1_ref[...],
                       preferred_element_type=jnp.float32)
               + bd1_ref[...])                                   # [TILE_S, 4H] f32
    h2 = (jnp.dot(h1.astype(jnp.bfloat16), wd2_ref[...],
                  preferred_element_type=jnp.float32)
          + bd2_ref[...])                                        # [TILE_S, H]  f32

    # ---- LayerNorm(H) (f32 epilogue) ---------------------------------------
    mean = jnp.mean(h2, axis=-1, keepdims=True)
    var = jnp.mean((h2 - mean) ** 2, axis=-1, keepdims=True)
    y = (h2 - mean) * jax.lax.rsqrt(var + eps)
    y = y * gamma_ref[...] + beta_ref[...]

    out_ref[...] = y.astype(out_ref.dtype)


# --------------------------------------------------------------------------
# Plain-JAX glue.
# --------------------------------------------------------------------------
def timestep_embedding(t, dim, max_period=10000):
    """Sinusoidal timestep embeddings (matches the PyTorch reference)."""
    assert dim % 2 == 0
    half = dim // 2
    freqs = jnp.exp(
        -math.log(max_period) * jnp.arange(half, dtype=jnp.float32) / half)
    args = t[..., None].astype(jnp.float32) * freqs[None]
    return jnp.concatenate([jnp.cos(args), jnp.sin(args)], axis=-1)


def init_params(key, hidden_size):
    h, h4 = hidden_size, hidden_size * 4
    ks = jax.random.split(key, 8)
    scale = 0.02

    def lin(kw, kb, fan_in, fan_out):
        w = scale * jax.random.normal(kw, (fan_in, fan_out), jnp.float32)
        b = scale * jax.random.normal(kb, (1, fan_out), jnp.float32)
        return w, b

    wt1, bt1 = lin(ks[0], ks[1], h, h4)     # time_embed[0]
    wt2, bt2 = lin(ks[2], ks[3], h4, h)     # time_embed[2]
    wd1, bd1 = lin(ks[4], ks[5], h, h4)     # decoder[0]
    wd2, bd2 = lin(ks[6], ks[7], h4, h)     # decoder[2]
    gamma = jnp.ones((1, h), jnp.float32)   # decoder LayerNorm weight
    beta = jnp.zeros((1, h), jnp.float32)   # decoder LayerNorm bias
    return dict(wt1=wt1, bt1=bt1, wt2=wt2, bt2=bt2,
                wd1=wd1, bd1=bd1, wd2=wd2, bd2=bd2,
                gamma=gamma, beta=beta)


def _largest_divisor_leq(n, cap):
    cap = min(n, cap)
    for d in range(cap, 0, -1):
        if n % d == 0:
            return d
    return n


def denoised_forward(params, rep_item, x_t, t, *, lambda_uncertainty,
                     condition=True, ln_eps=1e-5, seq_tile=256):
    """Pallas-backed equivalent of DenoisedModel.forward with the MLP decoder.

    rep_item, x_t: [B, S, H]; t: [B] (one timestep per batch element).
    mask_seq / mask_tgt are unused by the MLP decoder path.
    """
    B, S, H = x_t.shape
    H4 = 4 * H
    if not condition:
        rep_item = jnp.zeros_like(rep_item)

    # ---- time_embed MLP hoisted out of the hot kernel (tiny: B rows) -------
    # t.reshape(B, -1) -> [B, 1]; embedding -> [B, 1, H]; squeeze -> [B, H].
    temb_sin = timestep_embedding(t.reshape(B, -1), H)[:, 0, :]           # [B, H]
    h_t = _silu(temb_sin @ params["wt1"] + params["bt1"])
    time_emb = (h_t @ params["wt2"] + params["bt2"]).astype(jnp.float32)  # [B, H]

    # ---- weights for the hot decoder matmuls: bf16 (cast once, in wrapper) -
    wd1 = params["wd1"].astype(jnp.bfloat16)
    wd2 = params["wd2"].astype(jnp.bfloat16)
    bd1 = params["bd1"].astype(jnp.float32)
    bd2 = params["bd2"].astype(jnp.float32)
    gamma = params["gamma"].astype(jnp.float32)
    beta = params["beta"].astype(jnp.float32)

    tile_s = _largest_divisor_leq(S, seq_tile)
    grid = (B, S // tile_s)

    kernel = functools.partial(decoder_kernel,
                               lam=float(lambda_uncertainty),
                               eps=float(ln_eps))

    # Constant index_map -> these stay VMEM-resident across all grid steps.
    resident = lambda shape: pl.BlockSpec(shape, lambda b, s: (0, 0))
    act_spec = pl.BlockSpec((None, tile_s, H), lambda b, s: (b, s, 0))

    return pl.pallas_call(
        kernel,
        out_shape=jax.ShapeDtypeStruct((B, S, H), jnp.float32),
        grid=grid,
        in_specs=[
            resident((B, H)),        # time_emb (tiny, resident; row-indexed in kernel)
            act_spec,                # rep_item tile
            act_spec,                # x_t tile
            resident((H, H4)),       # wd1 (bf16, resident)
            resident((1, H4)),       # bd1
            resident((H4, H)),       # wd2 (bf16, resident)
            resident((1, H)),        # bd2
            resident((1, H)),        # gamma
            resident((1, H)),        # beta
        ],
        out_specs=act_spec,
        compiler_params=pltpu.CompilerParams(
            dimension_semantics=("parallel", "parallel")),
        # TODO(synk): for very large H (>=2048) tile the 4H axis of wd1/wd2 with a
        # pl.when-guarded accumulator instead of keeping both full weights resident,
        # and raise vmem_limit_bytes explicitly for the chosen generation.
    )(time_emb, rep_item, x_t, wd1, bd1, wd2, bd2, gamma, beta)


def denoised_forward_ref(params, rep_item, x_t, t, *, lambda_uncertainty,
                         condition=True, ln_eps=1e-5):
    """Pure-JAX reference mirroring the kernel's numerics (bf16 decoder matmuls,
    f32 accumulation and epilogue)."""
    B, S, H = x_t.shape
    if not condition:
        rep_item = jnp.zeros_like(rep_item)
    temb_sin = timestep_embedding(t.reshape(B, -1), H)[:, 0, :]
    h_t = _silu(temb_sin @ params["wt1"] + params["bt1"])
    time_emb = h_t @ params["wt2"] + params["bt2"]                        # [B, H]
    h = rep_item + lambda_uncertainty * (x_t + time_emb[:, None, :])
    wd1 = params["wd1"].astype(jnp.bfloat16)
    wd2 = params["wd2"].astype(jnp.bfloat16)
    h1 = _silu(jnp.dot(h.astype(jnp.bfloat16), wd1,
                       preferred_element_type=jnp.float32) + params["bd1"])
    h2 = jnp.dot(h1.astype(jnp.bfloat16), wd2,
                 preferred_element_type=jnp.float32) + params["bd2"]
    mean = jnp.mean(h2, axis=-1, keepdims=True)
    var = jnp.mean((h2 - mean) ** 2, axis=-1, keepdims=True)
    y = (h2 - mean) * jax.lax.rsqrt(var + ln_eps)
    return y * params["gamma"] + params["beta"]


if __name__ == "__main__":
    B, S, H = 2, 8, 32
    lambda_uncertainty = 0.1

    key = jax.random.PRNGKey(0)
    k_par, k_rep, k_x, k_t = jax.random.split(key, 4)

    params = init_params(k_par, H)
    rep_item = jax.random.normal(k_rep, (B, S, H), jnp.float32)
    x_t = jax.random.normal(k_x, (B, S, H), jnp.float32)
    t = jax.random.uniform(k_t, (B,), jnp.float32, 0.0, 1000.0)

    fwd = jax.jit(functools.partial(denoised_forward,
                                    lambda_uncertainty=lambda_uncertainty))
    out = fwd(params, rep_item, x_t, t)
    out = jax.block_until_ready(out)

    ref = denoised_forward_ref(params, rep_item, x_t, t,
                               lambda_uncertainty=lambda_uncertainty)
    assert out.shape == (B, S, H)
    assert jnp.allclose(out, ref, rtol=1e-2, atol=1e-2), "mismatch vs reference"

    print("KERNEL_OK")
</pallas_src>

<mosaic_0001>
module attributes {stable_mosaic.version = 11 : i64} {
  func.func @decoder_kernel(%arg0: i32, %arg1: i32, %arg2: memref<2x32xf32, #tpu.memory_space<vmem>>, %arg3: memref<1x8x32xf32, #tpu.memory_space<vmem>>, %arg4: memref<1x8x32xf32, #tpu.memory_space<vmem>>, %arg5: memref<32x128xbf16, #tpu.memory_space<vmem>>, %arg6: memref<1x128xf32, #tpu.memory_space<vmem>>, %arg7: memref<128x32xbf16, #tpu.memory_space<vmem>>, %arg8: memref<1x32xf32, #tpu.memory_space<vmem>>, %arg9: memref<1x32xf32, #tpu.memory_space<vmem>>, %arg10: memref<1x32xf32, #tpu.memory_space<vmem>>, %arg11: memref<1x8x32xf32, #tpu.memory_space<vmem>>) attributes {dimension_semantics = [#tpu.dimension_semantics<parallel>, #tpu.dimension_semantics<parallel>], iteration_bounds = array<i64: 2, 1>, scalar_prefetch = 0 : i64, scratch_operands = 0 : i64, tpu.core_type = #tpu.core_type<tc>, window_params = [{pipeline_mode = #tpu.pipeline_mode<synchronous>, transform_indices = @transform_0, window_bounds = array<i64: 2, 32>}, {transform_indices = @transform_1, window_bounds = array<i64: 1, 8, 32>}, {transform_indices = @transform_2, window_bounds = array<i64: 1, 8, 32>}, {pipeline_mode = #tpu.pipeline_mode<synchronous>, transform_indices = @transform_3, window_bounds = array<i64: 32, 128>}, {pipeline_mode = #tpu.pipeline_mode<synchronous>, transform_indices = @transform_4, window_bounds = array<i64: 1, 128>}, {pipeline_mode = #tpu.pipeline_mode<synchronous>, transform_indices = @transform_5, window_bounds = array<i64: 128, 32>}, {pipeline_mode = #tpu.pipeline_mode<synchronous>, transform_indices = @transform_6, window_bounds = array<i64: 1, 32>}, {pipeline_mode = #tpu.pipeline_mode<synchronous>, transform_indices = @transform_7, window_bounds = array<i64: 1, 32>}, {pipeline_mode = #tpu.pipeline_mode<synchronous>, transform_indices = @transform_8, window_bounds = array<i64: 1, 32>}, {transform_indices = @transform_9, window_bounds = array<i64: 1, 8, 32>}]} {
    %c0 = arith.constant 0 : index
    %c0_0 = arith.constant 0 : index
    %c0_1 = arith.constant 0 : index
    %0 = vector.load %arg3[%c0, %c0_0, %c0_1] : memref<1x8x32xf32, #tpu.memory_space<vmem>>, vector<1x8x32xf32>
    %1 = vector.shape_cast %0 : vector<1x8x32xf32> to vector<8x32xf32>
    %c0_2 = arith.constant 0 : index
    %c0_3 = arith.constant 0 : index
    %c0_4 = arith.constant 0 : index
    %2 = vector.load %arg4[%c0_2, %c0_3, %c0_4] : memref<1x8x32xf32, #tpu.memory_space<vmem>>, vector<1x8x32xf32>
    %3 = vector.shape_cast %2 : vector<1x8x32xf32> to vector<8x32xf32>
    %4 = arith.index_cast %arg0 : i32 to index
    %c0_5 = arith.constant 0 : index
    %5 = vector.load %arg2[%4, %c0_5] : memref<2x32xf32, #tpu.memory_space<vmem>>, vector<1x32xf32>
    %6 = vector.broadcast %5 : vector<1x32xf32> to vector<8x32xf32>
    %7 = arith.addf %3, %6 : vector<8x32xf32>
    %cst = arith.constant 1.000000e-01 : f32
    %8 = vector.broadcast %cst : f32 to vector<8x32xf32>
    %9 = arith.mulf %8, %7 : vector<8x32xf32>
    %10 = arith.addf %1, %9 : vector<8x32xf32>
    %11 = arith.truncf %10 : vector<8x32xf32> to vector<8x32xbf16>
    %c0_6 = arith.constant 0 : index
    %c0_7 = arith.constant 0 : index
    %12 = vector.load %arg5[%c0_6, %c0_7] : memref<32x128xbf16, #tpu.memory_space<vmem>>, vector<32x128xbf16>
    %cst_8 = arith.constant dense<0.000000e+00> : vector<8x128xf32>
    %13 = tpu.matmul %11, %12, %cst_8 {dimension_numbers = #tpu.dot_dimension_numbers<[1], [0], [0], [1], [0, 0, 1, 1], [], []>} : vector<8x32xbf16>, vector<32x128xbf16>, vector<8x128xf32> -> vector<8x128xf32>
    %c0_9 = arith.constant 0 : index
    %c0_10 = arith.constant 0 : index
    %14 = vector.load %arg6[%c0_9, %c0_10] : memref<1x128xf32, #tpu.memory_space<vmem>>, vector<1x128xf32>
    %15 = vector.broadcast %14 : vector<1x128xf32> to vector<8x128xf32>
    %16 = arith.addf %13, %15 : vector<8x128xf32>
    %17 = arith.negf %16 : vector<8x128xf32>
    %18 = math.exp %17 : vector<8x128xf32>
    %cst_11 = arith.constant 1.000000e+00 : f32
    %19 = vector.broadcast %cst_11 : f32 to vector<8x128xf32>
    %20 = arith.addf %19, %18 : vector<8x128xf32>
    %21 = arith.divf %19, %20 : vector<8x128xf32>
    %22 = arith.mulf %16, %21 : vector<8x128xf32>
    %23 = arith.truncf %22 : vector<8x128xf32> to vector<8x128xbf16>
    %c0_12 = arith.constant 0 : index
    %c0_13 = arith.constant 0 : index
    %24 = vector.load %arg7[%c0_12, %c0_13] : memref<128x32xbf16, #tpu.memory_space<vmem>>, vector<128x32xbf16>
    %cst_14 = arith.constant dense<0.000000e+00> : vector<8x32xf32>
    %25 = tpu.matmul %23, %24, %cst_14 {dimension_numbers = #tpu.dot_dimension_numbers<[1], [0], [0], [1], [0, 0, 1, 1], [], []>} : vector<8x128xbf16>, vector<128x32xbf16>, vector<8x32xf32> -> vector<8x32xf32>
    %c0_15 = arith.constant 0 : index
    %c0_16 = arith.constant 0 : index
    %26 = vector.load %arg8[%c0_15, %c0_16] : memref<1x32xf32, #tpu.memory_space<vmem>>, vector<1x32xf32>
    %27 = vector.broadcast %26 : vector<1x32xf32> to vector<8x32xf32>
    %28 = arith.addf %25, %27 : vector<8x32xf32>
    %cst_17 = arith.constant dense<0.000000e+00> : vector<8xf32>
    %29 = vector.multi_reduction <add>, %28, %cst_17 [1] : vector<8x32xf32> to vector<8xf32>
    %30 = vector.shape_cast %29 : vector<8xf32> to vector<8x1xf32>
    %cst_18 = arith.constant 3.200000e+01 : f32
    %31 = vector.broadcast %cst_18 : f32 to vector<8x1xf32>
    %32 = arith.divf %30, %31 : vector<8x1xf32>
    %33 = vector.broadcast %32 : vector<8x1xf32> to vector<8x32xf32>
    %34 = arith.subf %28, %33 : vector<8x32xf32>
    %35 = arith.mulf %34, %34 : vector<8x32xf32>
    %cst_19 = arith.constant dense<0.000000e+00> : vector<8xf32>
    %36 = vector.multi_reduction <add>, %35, %cst_19 [1] : vector<8x32xf32> to vector<8xf32>
    %37 = vector.shape_cast %36 : vector<8xf32> to vector<8x1xf32>
    %cst_20 = arith.constant 3.200000e+01 : f32
    %38 = vector.broadcast %cst_20 : f32 to vector<8x1xf32>
    %39 = arith.divf %37, %38 : vector<8x1xf32>
    %40 = vector.broadcast %32 : vector<8x1xf32> to vector<8x32xf32>
    %41 = arith.subf %28, %40 : vector<8x32xf32>
    %cst_21 = arith.constant 9.99999974E-6 : f32
    %42 = vector.broadcast %cst_21 : f32 to vector<8x1xf32>
    %43 = arith.addf %39, %42 : vector<8x1xf32>
    %44 = math.rsqrt %43 : vector<8x1xf32>
    %45 = vector.broadcast %44 : vector<8x1xf32> to vector<8x32xf32>
    %46 = arith.mulf %41, %45 : vector<8x32xf32>
    %c0_22 = arith.constant 0 : index
    %c0_23 = arith.constant 0 : index
    %47 = vector.load %arg9[%c0_22, %c0_23] : memref<1x32xf32, #tpu.memory_space<vmem>>, vector<1x32xf32>
    %48 = vector.broadcast %47 : vector<1x32xf32> to vector<8x32xf32>
    %49 = arith.mulf %46, %48 : vector<8x32xf32>
    %c0_24 = arith.constant 0 : index
    %c0_25 = arith.constant 0 : index
    %50 = vector.load %arg10[%c0_24, %c0_25] : memref<1x32xf32, #tpu.memory_space<vmem>>, vector<1x32xf32>
    %51 = vector.broadcast %50 : vector<1x32xf32> to vector<8x32xf32>
    %52 = arith.addf %49, %51 : vector<8x32xf32>
    %c0_26 = arith.constant 0 : index
    %c0_27 = arith.constant 0 : index
    %c0_28 = arith.constant 0 : index
    %53 = vector.load %arg11[%c0_26, %c0_27, %c0_28] : memref<1x8x32xf32, #tpu.memory_space<vmem>>, vector<1x8x32xf32>
    %54 = vector.shape_cast %53 : vector<1x8x32xf32> to vector<8x32xf32>
    %55 = vector.shape_cast %52 : vector<8x32xf32> to vector<1x8x32xf32>
    tpu.vector_store %arg11[%c0_26, %c0_27, %c0_28], %55 {strides = array<i32>} : memref<1x8x32xf32, #tpu.memory_space<vmem>>, vector<1x8x32xf32>,
    return
  }
  func.func @transform_0(%arg0: i32, %arg1: i32) -> (i32, i32) {
    %c0_i32 = arith.constant 0 : i32
    %c0_i32_0 = arith.constant 0 : i32
    %c0_i32_1 = arith.constant 0 : i32
    return %c0_i32, %c0_i32_0 : i32, i32
  }
  func.func @transform_1(%arg0: i32, %arg1: i32) -> (i32, i32, i32) {
    %c0_i32 = arith.constant 0 : i32
    %c0_i32_0 = arith.constant 0 : i32
    return %arg0, %arg1, %c0_i32 : i32, i32, i32
  }
  func.func @transform_2(%arg0: i32, %arg1: i32) -> (i32, i32, i32) {
    %c0_i32 = arith.constant 0 : i32
    %c0_i32_0 = arith.constant 0 : i32
    return %arg0, %arg1, %c0_i32 : i32, i32, i32
  }
  func.func @transform_3(%arg0: i32, %arg1: i32) -> (i32, i32) {
    %c0_i32 = arith.constant 0 : i32
    %c0_i32_0 = arith.constant 0 : i32
    %c0_i32_1 = arith.constant 0 : i32
    return %c0_i32, %c0_i32_0 : i32, i32
  }
  func.func @transform_4(%arg0: i32, %arg1: i32) -> (i32, i32) {
    %c0_i32 = arith.constant 0 : i32
    %c0_i32_0 = arith.constant 0 : i32
    %c0_i32_1 = arith.constant 0 : i32
    return %c0_i32, %c0_i32_0 : i32, i32
  }
  func.func @transform_5(%arg0: i32, %arg1: i32) -> (i32, i32) {
    %c0_i32 = arith.constant 0 : i32
    %c0_i32_0 = arith.constant 0 : i32
    %c0_i32_1 = arith.constant 0 : i32
    return %c0_i32, %c0_i32_0 : i32, i32
  }
  func.func @transform_6(%arg0: i32, %arg1: i32) -> (i32, i32) {
    %c0_i32 = arith.constant 0 : i32
    %c0_i32_0 = arith.constant 0 : i32
    %c0_i32_1 = arith.constant 0 : i32
    return %c0_i32, %c0_i32_0 : i32, i32
  }
  func.func @transform_7(%arg0: i32, %arg1: i32) -> (i32, i32) {
    %c0_i32 = arith.constant 0 : i32
    %c0_i32_0 = arith.constant 0 : i32
    %c0_i32_1 = arith.constant 0 : i32
    return %c0_i32, %c0_i32_0 : i32, i32
  }
  func.func @transform_8(%arg0: i32, %arg1: i32) -> (i32, i32) {
    %c0_i32 = arith.constant 0 : i32
    %c0_i32_0 = arith.constant 0 : i32
    %c0_i32_1 = arith.constant 0 : i32
    return %c0_i32, %c0_i32_0 : i32, i32
  }
  func.func @transform_9(%arg0: i32, %arg1: i32) -> (i32, i32, i32) {
    %c0_i32 = arith.constant 0 : i32
    %c0_i32_0 = arith.constant 0 : i32
    return %arg0, %arg1, %c0_i32 : i32, i32, i32
  }
}

</mosaic_0001>

<llo_original>
// kernel: denoised_forward.1
$region0: #{denoised_forward.1}
  #allocation0 [shape = 'u32[]', space=smem, size = 0x4, offset = 0x4, fixed_abs, tag = 'smem constant byte address 0x4 - core index']
  #allocation1 [shape = 'u32[144,128]{1,0:T(1,128)}', space=vmem, size = 0x12000, scoped, tag = 'internal scratch']
  %s0 = inlined_call_operand.vmem [shape: f32[2,32], index: 0, kind: input, shape index: {}]
  %s1 = inlined_call_operand.vmem [shape: f32[2,8,32], index: 1, kind: input, shape index: {}]
  %s2 = inlined_call_operand.vmem [shape: f32[2,8,32], index: 2, kind: input, shape index: {}]
  %s3 = inlined_call_operand.vmem [shape: bf16[32,128], index: 3, kind: input, shape index: {}]
  %s4 = inlined_call_operand.vmem [shape: f32[1,128], index: 4, kind: input, shape index: {}]
  %s5 = inlined_call_operand.vmem [shape: bf16[128,32], index: 5, kind: input, shape index: {}]
  %s6 = inlined_call_operand.vmem [shape: f32[1,32], index: 6, kind: input, shape index: {}]
  %s7 = inlined_call_operand.vmem [shape: f32[1,32], index: 7, kind: input, shape index: {}]
  %s8 = inlined_call_operand.vmem [shape: f32[1,32], index: 8, kind: input, shape index: {}]
  %s9 = inlined_call_operand.hbm [shape: f32[2,8,32], index: 9, kind: output, shape index: {}]
  %s10 = sld [smem:[#allocation0]]
  $region69: #{denoised_forward.1} parent=0
    _
  %s12 = ssub.s32 1, %s10
  %s13 = scalar_select 0, %s12, %s10
  $region1: #{denoised_forward.1} parent=0
    #allocation2 [shape = 'u8[8192]{0}', space=vmem, size = 0x2000, scoped, tag = 'output window, operand 0']
    #allocation3 [shape = 's32[2]{0}', space=sflag, size = 0x8, scoped, tag = 'scoped memory for denoised_forward.1']
    %14 = vsyncpa [#allocation3], 0
    %s15 = scalar_lea.sflag [#allocation3], 1
    %16 = vsyncpa %s15, 0
    loop: start=0, step=1, limit=4
    $region2: #{denoised_forward.1} parent=1 // loop_pre_header
      _
    $region3: #{denoised_forward.1} parent=1 // loop_header
      %s18 = sphi 0, %s22
      %p19 = scmp.ge.s32.totalorder %s18, 4
      %s25 = sphi 0, %s37
      %s26 = sphi 0, %s33
      %s27 = sphi 0, %s25
      %s28 = sphi 0, %s26
      %s29 = sphi 0, %s27
      %s30 = sphi 0, %s28
      %s38 = sphi 0, %s38
      %s40 = sphi 0, %s38
      %s41 = sphi 0, %s40
      %s55 = sphi 0, %s41
      %s63 = sphi 0, %s65
      %s66 = sphi 0, %s63
      %s67 = sphi 0, %s66
      %s83 = sphi 0, %s67
      %s91 = sphi 0, %s93
      %s94 = sphi 0, %s91
      %s95 = sphi 0, %s94
      %s111 = sphi 0, %s95
      %s115 = sphi 0, %s115
      %s117 = sphi 0, %s115
      %s118 = sphi 0, %s117
      %s132 = sphi 0, %s118
      %s136 = sphi 0, %s136
      %s138 = sphi 0, %s136
      %s139 = sphi 0, %s138
      %s153 = sphi 0, %s139
      %s157 = sphi 0, %s157
      %s159 = sphi 0, %s157
      %s160 = sphi 0, %s159
      %s174 = sphi 0, %s160
      %s178 = sphi 0, %s178
      %s180 = sphi 0, %s178
      %s181 = sphi 0, %s180
      %s195 = sphi 0, %s181
      %s199 = sphi 0, %s199
      %s201 = sphi 0, %s199
      %s202 = sphi 0, %s201
      %s216 = sphi 0, %s202
      %s220 = sphi 0, %s220
      %s222 = sphi 0, %s220
      %s223 = sphi 0, %s222
      %s237 = sphi 0, %s223
      %s245 = sphi 0, %s247
      %s248 = sphi 0, %s245
      %s249 = sphi 0, %s248
      %s265 = sphi 0, %s249
    $region4: #{denoised_forward.1} parent=1 // loop_header_branch
      %21 = sbr.rel (%p19) target = $region8
    $region5: #{denoised_forward.1} parent=1 // loop_body
      %s23 = ssub.s32 %s18, 1
      %s24 = ssub.s32 %s18, 2
      %s31 = sadd.s32 1, %s26
      %p32 = scmp.ge.s32.totalorder %s31, 1
      %s33 = scalar_select %p32, 0, %s31
      %s34 = sadd.s32 1, %s25
      %s35 = scalar_select %p32, %s34, %s25
      %p36 = scmp.ge.s32.totalorder %s35, 2
      %s37 = scalar_select %p36, 0, %s35
      %s39 = sadd.s32 %s38, 1
      %p42 = scmp.eq.s32.totalorder %s18, 1
      %p43 = scmp.ne.s32.totalorder %s38, %s40
      %p44 = scmp.eq.s32.totalorder %s18, 0
      %p45 = por %p43, %p44
      %p46 = scmp.ne.s32.totalorder %s38, %s40
      %p47 = scmp.eq.s32.totalorder %s23, 1
      %p48 = por %p46, %p47
      %p49 = scmp.ne.s32.totalorder %s40, %s41
      %p50 = scmp.eq.s32.totalorder %s23, 0
      %p51 = por %p49, %p50
      %p52 = scmp.ne.s32.totalorder %s40, %s41
      %p53 = scmp.eq.s32.totalorder %s24, 1
      %p54 = por %p52, %p53
      %p56 = scmp.ne.s32.totalorder %s41, %s55
      %p57 = scmp.eq.s32.totalorder %s24, 0
      %p58 = por %p56, %p57
      %s59 = ssub.s32 %s25, %s37
      %s60 = ssub.s32 %s26, %s33
      %s61 = sor.u32 %s59, %s60
      %p62 = scmp.eq.s32.totalorder %s61, 0
      %s64 = sadd.s32 %s63, 1
      %s65 = scalar_select %p62, %s63, %s64
      %p68 = pneg %p62
      %p69 = scmp.eq.s32.totalorder %s18, 1
      %p70 = por %p68, %p69
      %p71 = scmp.ne.s32.totalorder %s63, %s66
      %p72 = scmp.eq.s32.totalorder %s18, 0
      %p73 = por %p71, %p72
      %p74 = scmp.ne.s32.totalorder %s63, %s66
      %p75 = scmp.eq.s32.totalorder %s23, 1
      %p76 = por %p74, %p75
      %p77 = scmp.ne.s32.totalorder %s66, %s67
      %p78 = scmp.eq.s32.totalorder %s23, 0
      %p79 = por %p77, %p78
      %p80 = scmp.ne.s32.totalorder %s66, %s67
      %p81 = scmp.eq.s32.totalorder %s24, 1
      %p82 = por %p80, %p81
      %p84 = scmp.ne.s32.totalorder %s67, %s83
      %p85 = scmp.eq.s32.totalorder %s24, 0
      %p86 = por %p84, %p85
      %s87 = ssub.s32 %s25, %s37
      %s88 = ssub.s32 %s26, %s33
      %s89 = sor.u32 %s87, %s88
      %p90 = scmp.eq.s32.totalorder %s89, 0
      %s92 = sadd.s32 %s91, 1
      %s93 = scalar_select %p90, %s91, %s92
      %p96 = pneg %p90
      %p97 = scmp.eq.s32.totalorder %s18, 1
      %p98 = por %p96, %p97
      %p99 = scmp.ne.s32.totalorder %s91, %s94
      %p100 = scmp.eq.s32.totalorder %s18, 0
      %p101 = por %p99, %p100
      %p102 = scmp.ne.s32.totalorder %s91, %s94
      %p103 = scmp.eq.s32.totalorder %s23, 1
      %p104 = por %p102, %p103
      %p105 = scmp.ne.s32.totalorder %s94, %s95
      %p106 = scmp.eq.s32.totalorder %s23, 0
      %p107 = por %p105, %p106
      %p108 = scmp.ne.s32.totalorder %s94, %s95
      %p109 = scmp.eq.s32.totalorder %s24, 1
      %p110 = por %p108, %p109
      %p112 = scmp.ne.s32.totalorder %s95, %s111
      %p113 = scmp.eq.s32.totalorder %s24, 0
      %p114 = por %p112, %p113
      %s116 = sadd.s32 %s115, 1
      %p119 = scmp.eq.s32.totalorder %s18, 1
      %p120 = scmp.ne.s32.totalorder %s115, %s117
      %p121 = scmp.eq.s32.totalorder %s18, 0
      %p122 = por %p120, %p121
      %p123 = scmp.ne.s32.totalorder %s115, %s117
      %p124 = scmp.eq.s32.totalorder %s23, 1
      %p125 = por %p123, %p124
      %p126 = scmp.ne.s32.totalorder %s117, %s118
      %p127 = scmp.eq.s32.totalorder %s23, 0
      %p128 = por %p126, %p127
      %p129 = scmp.ne.s32.totalorder %s117, %s118
      %p130 = scmp.eq.s32.totalorder %s24, 1
      %p131 = por %p129, %p130
      %p133 = scmp.ne.s32.totalorder %s118, %s132
      %p134 = scmp.eq.s32.totalorder %s24, 0
      %p135 = por %p133, %p134
      %s137 = sadd.s32 %s136, 1
      %p140 = scmp.eq.s32.totalorder %s18, 1
      %p141 = scmp.ne.s32.totalorder %s136, %s138
      %p142 = scmp.eq.s32.totalorder %s18, 0
      %p143 = por %p141, %p142
      %p144 = scmp.ne.s32.totalorder %s136, %s138
      %p145 = scmp.eq.s32.totalorder %s23, 1
      %p146 = por %p144, %p145
      %p147 = scmp.ne.s32.totalorder %s138, %s139
      %p148 = scmp.eq.s32.totalorder %s23, 0
      %p149 = por %p147, %p148
      %p150 = scmp.ne.s32.totalorder %s138, %s139
      %p151 = scmp.eq.s32.totalorder %s24, 1
      %p152 = por %p150, %p151
      %p154 = scmp.ne.s32.totalorder %s139, %s153
      %p155 = scmp.eq.s32.totalorder %s24, 0
      %p156 = por %p154, %p155
      %s158 = sadd.s32 %s157, 1
      %p161 = scmp.eq.s32.totalorder %s18, 1
      %p162 = scmp.ne.s32.totalorder %s157, %s159
      %p163 = scmp.eq.s32.totalorder %s18, 0
      %p164 = por %p162, %p163
      %p165 = scmp.ne.s32.totalorder %s157, %s159
      %p166 = scmp.eq.s32.totalorder %s23, 1
      %p167 = por %p165, %p166
      %p168 = scmp.ne.s32.totalorder %s159, %s160
      %p169 = scmp.eq.s32.totalorder %s23, 0
      %p170 = por %p168, %p169
      %p171 = scmp.ne.s32.totalorder %s159, %s160
      %p172 = scmp.eq.s32.totalorder %s24, 1
      %p173 = por %p171, %p172
      %p175 = scmp.ne.s32.totalorder %s160, %s174
      %p176 = scmp.eq.s32.totalorder %s24, 0
      %p177 = por %p175, %p176
      %s179 = sadd.s32 %s178, 1
      %p182 = scmp.eq.s32.totalorder %s18, 1
      %p183 = scmp.ne.s32.totalorder %s178, %s180
      %p184 = scmp.eq.s32.totalorder %s18, 0
      %p185 = por %p183, %p184
      %p186 = scmp.ne.s32.totalorder %s178, %s180
      %p187 = scmp.eq.s32.totalorder %s23, 1
      %p188 = por %p186, %p187
      %p189 = scmp.ne.s32.totalorder %s180, %s181
      %p190 = scmp.eq.s32.totalorder %s23, 0
      %p191 = por %p189, %p190
      %p192 = scmp.ne.s32.totalorder %s180, %s181
      %p193 = scmp.eq.s32.totalorder %s24, 1
      %p194 = por %p192, %p193
      %p196 = scmp.ne.s32.totalorder %s181, %s195
      %p197 = scmp.eq.s32.totalorder %s24, 0
      %p198 = por %p196, %p197
      %s200 = sadd.s32 %s199, 1
      %p203 = scmp.eq.s32.totalorder %s18, 1
      %p204 = scmp.ne.s32.totalorder %s199, %s201
      %p205 = scmp.eq.s32.totalorder %s18, 0
      %p206 = por %p204, %p205
      %p207 = scmp.ne.s32.totalorder %s199, %s201
      %p208 = scmp.eq.s32.totalorder %s23, 1
      %p209 = por %p207, %p208
      %p210 = scmp.ne.s32.totalorder %s201, %s202
      %p211 = scmp.eq.s32.totalorder %s23, 0
      %p212 = por %p210, %p211
      %p213 = scmp.ne.s32.totalorder %s201, %s202
      %p214 = scmp.eq.s32.totalorder %s24, 1
      %p215 = por %p213, %p214
      %p217 = scmp.ne.s32.totalorder %s202, %s216
      %p218 = scmp.eq.s32.totalorder %s24, 0
      %p219 = por %p217, %p218
      %s221 = sadd.s32 %s220, 1
      %p224 = scmp.eq.s32.totalorder %s18, 1
      %p225 = scmp.ne.s32.totalorder %s220, %s222
      %p226 = scmp.eq.s32.totalorder %s18, 0
      %p227 = por %p225, %p226
      %p228 = scmp.ne.s32.totalorder %s220, %s222
      %p229 = scmp.eq.s32.totalorder %s23, 1
      %p230 = por %p228, %p229
      %p231 = scmp.ne.s32.totalorder %s222, %s223
      %p232 = scmp.eq.s32.totalorder %s23, 0
      %p233 = por %p231, %p232
      %p234 = scmp.ne.s32.totalorder %s222, %s223
      %p235 = scmp.eq.s32.totalorder %s24, 1
      %p236 = por %p234, %p235
      %p238 = scmp.ne.s32.totalorder %s223, %s237
      %p239 = scmp.eq.s32.totalorder %s24, 0
      %p240 = por %p238, %p239
      %s241 = ssub.s32 %s25, %s37
      %s242 = ssub.s32 %s26, %s33
      %s243 = sor.u32 %s241, %s242
      %p244 = scmp.eq.s32.totalorder %s243, 0
      %s246 = sadd.s32 %s245, 1
      %s247 = scalar_select %p244, %s245, %s246
      %p250 = pneg %p244
      %p251 = scmp.eq.s32.totalorder %s18, 1
      %p252 = por %p250, %p251
      %p253 = scmp.ne.s32.totalorder %s245, %s248
      %p254 = scmp.eq.s32.totalorder %s18, 0
      %p255 = por %p253, %p254
      %p256 = scmp.ne.s32.totalorder %s245, %s248
      %p257 = scmp.eq.s32.totalorder %s23, 1
      %p258 = por %p256, %p257
      %p259 = scmp.ne.s32.totalorder %s248, %s249
      %p260 = scmp.eq.s32.totalorder %s23, 0
      %p261 = por %p259, %p260
      %p262 = scmp.ne.s32.totalorder %s248, %s249
      %p263 = scmp.eq.s32.totalorder %s24, 1
      %p264 = por %p262, %p263
      %p266 = scmp.ne.s32.totalorder %s249, %s265
      %p267 = scmp.eq.s32.totalorder %s24, 0
      %p268 = por %p266, %p267
      %p269 = scmp.le.s32.totalorder 1, %s18
      %p270 = scmp.lt.s32.totalorder %s18, 3
      %p271 = pnand %p269, %p270
      %p272 = pneg %p271
      // Predicated region
      $region9: #{denoised_forward.1} parent=5 // pred_check
        _
      $region10: #{denoised_forward.1} parent=5 // pred_check_branch
        %274 = sbr.rel (%p271) target = $region12
      $region11: #{denoised_forward.1} parent=5 // pred_region
        %s275 = ssub.s32 %s18, 1
        // Predicated region
        $region13: #{denoised_forward.1} parent=11 // pred_check
          %p276 = pneg %p51
        $region14: #{denoised_forward.1} parent=11 // pred_check_branch
          %278 = sbr.rel (%p276) target = $region16
        $region15: #{denoised_forward.1} parent=11 // pred_region
          _
        $region16: #{denoised_forward.1} parent=11 // pred_fallthru
          _
        // Predicated region
        $region17: #{denoised_forward.1} parent=11 // pred_check
          %p279 = pneg %p128
        $region18: #{denoised_forward.1} parent=11 // pred_check_branch
          %281 = sbr.rel (%p279) target = $region20
        $region19: #{denoised_forward.1} parent=11 // pred_region
          _
        $region20: #{denoised_forward.1} parent=11 // pred_fallthru
          _
        // Predicated region
        $region21: #{denoised_forward.1} parent=11 // pred_check
          %p282 = pneg %p149
        $region22: #{denoised_forward.1} parent=11 // pred_check_branch
          %284 = sbr.rel (%p282) target = $region24
        $region23: #{denoised_forward.1} parent=11 // pred_region
          _
        $region24: #{denoised_forward.1} parent=11 // pred_fallthru
          _
        // Predicated region
        $region25: #{denoised_forward.1} parent=11 // pred_check
          %p285 = pneg %p170
        $region26: #{denoised_forward.1} parent=11 // pred_check_branch
          %287 = sbr.rel (%p285) target = $region28
        $region27: #{denoised_forward.1} parent=11 // pred_region
          _
        $region28: #{denoised_forward.1} parent=11 // pred_fallthru
          _
        // Predicated region
        $region29: #{denoised_forward.1} parent=11 // pred_check
          %p288 = pneg %p191
        $region30: #{denoised_forward.1} parent=11 // pred_check_branch
          %290 = sbr.rel (%p288) target = $region32
        $region31: #{denoised_forward.1} parent=11 // pred_region
          _
        $region32: #{denoised_forward.1} parent=11 // pred_fallthru
          _
        // Predicated region
        $region33: #{denoised_forward.1} parent=11 // pred_check
          %p291 = pneg %p212
        $region34: #{denoised_forward.1} parent=11 // pred_check_branch
          %293 = sbr.rel (%p291) target = $region36
        $region35: #{denoised_forward.1} parent=11 // pred_region
          _
        $region36: #{denoised_forward.1} parent=11 // pred_fallthru
          _
        // Predicated region
        $region37: #{denoised_forward.1} parent=11 // pred_check
          %p294 = pneg %p233
        $region38: #{denoised_forward.1} parent=11 // pred_check_branch
          %296 = sbr.rel (%p294) target = $region40
        $region39: #{denoised_forward.1} parent=11 // pred_region
          _
        $region40: #{denoised_forward.1} parent=11 // pred_fallthru
          _
      $region12: #{denoised_forward.1} parent=5 // pred_fallthru
        _
      %p297 = scmp.lt.s32.totalorder %s18, 2
      // Predicated region
      $region41: #{denoised_forward.1} parent=5 // pred_check
        %p298 = pneg %p297
      $region42: #{denoised_forward.1} parent=5 // pred_check_branch
        %300 = sbr.rel (%p298) target = $region44
      $region43: #{denoised_forward.1} parent=5 // pred_region
        // Predicated region
        $region45: #{denoised_forward.1} parent=43 // pred_check
          %p301 = pneg %p73
        $region46: #{denoised_forward.1} parent=43 // pred_check_branch
          %303 = sbr.rel (%p301) target = $region48
        $region47: #{denoised_forward.1} parent=43 // pred_region
          %p304 = scmp.lt.s32.totalorder %s25, 1
          %s305 = scalar_select %p304, %s25, 1
          %p306 = scmp.lt.s32.totalorder %s26, 0
          %s307 = scalar_select %p306, %s26, 0
          %s308 = sadd.s32 %s307, %s305
          %s309 = smul.addr %s308, 8
          %s310 = scalar_lea.vmem %s1, %s309
        $region48: #{denoised_forward.1} parent=43 // pred_fallthru
          _
        // Predicated region
        $region49: #{denoised_forward.1} parent=43 // pred_check
          %p311 = pneg %p101
        $region50: #{denoised_forward.1} parent=43 // pred_check_branch
          %313 = sbr.rel (%p311) target = $region52
        $region51: #{denoised_forward.1} parent=43 // pred_region
          %p314 = scmp.lt.s32.totalorder %s25, 1
          %s315 = scalar_select %p314, %s25, 1
          %p316 = scmp.lt.s32.totalorder %s26, 0
          %s317 = scalar_select %p316, %s26, 0
          %s318 = sadd.s32 %s317, %s315
          %s319 = smul.addr %s318, 8
          %s320 = scalar_lea.vmem %s2, %s319
        $region52: #{denoised_forward.1} parent=43 // pred_fallthru
          _
      $region44: #{denoised_forward.1} parent=5 // pred_fallthru
        _
      %p321 = scmp.le.s32.totalorder 1, %s18
      %p322 = scmp.lt.s32.totalorder %s18, 3
      %p323 = pnand %p321, %p322
      %p324 = pneg %p323
      // Predicated region
      $region53: #{denoised_forward.1} parent=5 // pred_check
        _
      $region54: #{denoised_forward.1} parent=5 // pred_check_branch
        %326 = sbr.rel (%p323) target = $region56
      $region55: #{denoised_forward.1} parent=5 // pred_region
        %s327 = ssub.s32 %s18, 1
        %p328 = pneg %p51
        %p329 = pneg %p48
        %p330 = scmp.lt.s32.totalorder %s27, 1
        %s331 = scalar_select %p330, %s27, 1
        %p332 = scmp.lt.s32.totalorder %s28, 0
        %s333 = scalar_select %p332, %s28, 0
        %s334 = sadd.s32 %s333, %s331
        %s335 = smul.addr %s334, 8
        %s336 = scalar_lea.vmem %s1, %s335
        %p337 = pneg %p79
        %p338 = pneg %p76
        %p339 = scmp.lt.s32.totalorder %s27, 1
        %s340 = scalar_select %p339, %s27, 1
        %p341 = scmp.lt.s32.totalorder %s28, 0
        %s342 = scalar_select %p341, %s28, 0
        %s343 = sadd.s32 %s342, %s340
        %s344 = smul.addr %s343, 8
        %s345 = scalar_lea.vmem %s2, %s344
        %p346 = pneg %p107
        %p347 = pneg %p104
        %p348 = pneg %p128
        %p349 = pneg %p125
        %p350 = pneg %p149
        %p351 = pneg %p146
        %p352 = pneg %p170
        %p353 = pneg %p167
        %p354 = pneg %p191
        %p355 = pneg %p188
        %p356 = pneg %p212
        %p357 = pneg %p209
        %p358 = pneg %p233
        %p359 = pneg %p230
        %p360 = pneg %p261
        %p361 = pneg %p258
        %s362 = sand.u32 %s248, 1
        %s363 = scalar_lea.sflag [#allocation3], %s362
        %s364 = sand.u32 %s248, 1
        %s365 = smul.addr %s364, 8
        %s366 = scalar_lea.vmem [#allocation2], %s365
        %p367 = scmp.lt.s32.totalorder %s27, 1
        %s368 = scalar_select %p367, %s27, 1
        %p369 = scmp.lt.s32.totalorder %s28, 0
        %s370 = scalar_select %p369, %s28, 0
        %s371 = sadd.s32 %s370, %s368
        %s372 = smul.addr %s371, 8
        %s373 = scalar_lea.vmem %s1, %s372
        %p374 = scmp.lt.s32.totalorder %s27, 1
        %s375 = scalar_select %p374, %s27, 1
        %p376 = scmp.lt.s32.totalorder %s28, 0
        %s377 = scalar_select %p376, %s28, 0
        %s378 = sadd.s32 %s377, %s375
        %s379 = smul.addr %s378, 8
        %s380 = scalar_lea.vmem %s2, %s379
        %v382 = vld [vmem:[%s373] sm:$0xff]
        %v383 = vld [vmem:[%s380] sm:$0xff]
        %s384 = scalar_lea.vmem %s0, %s27
        %v385 = vld [vmem:[%s384] sm:$0x1]
        %v386 = vlaneseq
        %v387 = vshrl.u32 %v386, 7
        %v388 = vsub.s32 0, %v387
        %v389 = vrot.slane %v385, %v388
        %v390 = vadd.f32 %v383, %v389
        %v391 = vmul.f32 %v390, 0.1
        %v392 = vadd.f32 %v382, %v391
        %v393 = vpack.c.bf16 %v392, %v392
        %v394 = vld [vmem:[%s3] sm:$0xf]
        %v395 = vld [vmem:[%s3 + $0x4] sm:$0xf]
        %v396 = vld [vmem:[%s3 + $0x8] sm:$0xf]
        %v397 = vld [vmem:[%s3 + $0xc] sm:$0xf]
        %v398 = vld [vmem:[%s4] sm:$0x1]
        %v400 = vlaneseq
        %v401 = vshrl.u32 %v400, 7
        %v402 = vsub.s32 0, %v401
        %v403 = vrot.slane %v398, %v402
        %v409 = vunpack.c.l.b16 %v394
        %v410 = vunpack.c.l.b16 %v395
        %v411 = vunpack.c.l.b16 %v396
        %v412 = vunpack.c.l.b16 %v397
        %v413 = vpack.c.b16 %v410, %v409
        %v414 = vpack.c.b16 %v412, %v411
        %vm417 = vcmask 261120
        %v419 = vsel %vm417, %v393, 0
        %421 = vmatprep.subr.bf16.mxu0 0
        %422 = vmatpush1.bf16.msra.mxu0 %v413
        %423 = vmatprep.subr.bf16.mxu0 0
        %424 = vmatpush1.bf16.msra.mxu0 %v414
        %425 = vmatprep.subr.bf16.mxu0 0
        %426 = vmatpush1.bf16.msra.mxu0 0
        %427 = vmatprep.subr.bf16.mxu0 0
        %428 = vmatpush1.bf16.msra.mxu0 0
        %429 = vmatprep.subr.bf16.mxu0 0
        %430 = vmatpush1.bf16.msra.mxu0 0
        %431 = vmatprep.subr.bf16.mxu0 0
        %432 = vmatpush1.bf16.msra.mxu0 0
        %433 = vmatprep.subr.bf16.mxu0 0
        %434 = vmatpush1.bf16.msra.mxu0 0
        %435 = vmatprep.subr.bf16.mxu0 0
        %436 = vmatpush1.bf16.msra.mxu0 0
        %437 = vmatprep.subr.bf16.mxu0 0
        %438 = vmatpush1.bf16.msra.mxu0 0
        %439 = vmatprep.subr.bf16.mxu0 0
        %440 = vmatpush1.bf16.msra.mxu0 0
        %441 = vmatprep.subr.bf16.mxu0 0
        %442 = vmatpush1.bf16.msra.mxu0 0
        %443 = vmatprep.subr.bf16.mxu0 0
        %444 = vmatpush1.bf16.msra.mxu0 0
        %445 = vmatprep.subr.bf16.mxu0 0
        %446 = vmatpush1.bf16.msra.mxu0 0
        %447 = vmatprep.subr.bf16.mxu0 0
        %448 = vmatpush1.bf16.msra.mxu0 0
        %449 = vmatprep.subr.bf16.mxu0 0
        %450 = vmatpush1.bf16.msra.mxu0 0
        %451 = vmatprep.subr.bf16.mxu0 0
        %452 = vmatpush1.bf16.msra.mxu0 0
        %453 = vmatprep.mubr.bf16.mxu0 0
        %454 = vmatmul.mubr.bf16.gmra.mrb[0].mxu0 %v419
        %v455 = vpop.f32.mrb[0].mxu0
        %v456 = vadd.f32 %v403, %v455
        %v457 = vpop.f32.mrb[0].mxu0
        %v458 = vpop.f32.mrb[0].mxu0
        %v459 = vpop.f32.mrb[0].mxu0
        %460 = vdwg.mxu0
        %v461 = vxor.u32 %v456, 2147483648
        %v462 = vmul.f32 %v461, 1.442695
        %v463 = vpow.pop %v462
        %v464 = vadd.f32 %v463, 1.0
        %v465 = vrcp.pop %v464
        %v466 = vmul.f32 1.0, %v465
        %v467 = vmul.f32 %v456, %v466
        %v468 = vpack.c.bf16 %v467, %v467
        %v469 = vld [vmem:[%s5] sm:$0xf]
        %v470 = vld [vmem:[%s5 + $0x4] sm:$0xf]
        %v471 = vld [vmem:[%s5 + $0x8] sm:$0xf]
        %v472 = vld [vmem:[%s5 + $0xc] sm:$0xf]
        %v473 = vld [vmem:[%s5 + $0x10] sm:$0xf]
        %v474 = vld [vmem:[%s5 + $0x14] sm:$0xf]
        %v475 = vld [vmem:[%s5 + $0x18] sm:$0xf]
        %v476 = vld [vmem:[%s5 + $0x1c] sm:$0xf]
        %v477 = vld [vmem:[%s5 + $0x20] sm:$0xf]
        %v478 = vld [vmem:[%s5 + $0x24] sm:$0xf]
        %v479 = vld [vmem:[%s5 + $0x28] sm:$0xf]
        %v480 = vld [vmem:[%s5 + $0x2c] sm:$0xf]
        %v481 = vld [vmem:[%s5 + $0x30] sm:$0xf]
        %v482 = vld [vmem:[%s5 + $0x34] sm:$0xf]
        %v483 = vld [vmem:[%s5 + $0x38] sm:$0xf]
        %v484 = vld [vmem:[%s5 + $0x3c] sm:$0xf]
        %v485 = vld [vmem:[%s6] sm:$0x1]
        %v487 = vlaneseq
        %v488 = vshrl.u32 %v487, 7
        %v489 = vsub.s32 0, %v488
        %v490 = vrot.slane %v485, %v489
        %v508 = vunpack.c.l.b16 %v469
        %v509 = vunpack.c.l.b16 %v470
        %v510 = vunpack.c.l.b16 %v471
        %v511 = vunpack.c.l.b16 %v472
        %v512 = vunpack.c.l.b16 %v473
        %v513 = vunpack.c.l.b16 %v474
        %v514 = vunpack.c.l.b16 %v475
        %v515 = vunpack.c.l.b16 %v476
        %v516 = vunpack.c.l.b16 %v477
        %v517 = vunpack.c.l.b16 %v478
        %v518 = vunpack.c.l.b16 %v479
        %v519 = vunpack.c.l.b16 %v480
        %v520 = vunpack.c.l.b16 %v481
        %v521 = vunpack.c.l.b16 %v482
        %v522 = vunpack.c.l.b16 %v483
        %v523 = vunpack.c.l.b16 %v484
        %v524 = vpack.c.b16 %v509, %v508
        %v525 = vpack.c.b16 %v511, %v510
        %v526 = vpack.c.b16 %v513, %v512
        %v527 = vpack.c.b16 %v515, %v514
        %v528 = vpack.c.b16 %v517, %v516
        %v529 = vpack.c.b16 %v519, %v518
        %v530 = vpack.c.b16 %v521, %v520
        %v531 = vpack.c.b16 %v523, %v522
        %540 = vmatprep.subr.bf16.mxu0 0
        %541 = vmatpush1.bf16.msra.mxu0 %v524
        %542 = vmatprep.subr.bf16.mxu0 0
        %543 = vmatpush1.bf16.msra.mxu0 %v525
        %544 = vmatprep.subr.bf16.mxu0 0
        %545 = vmatpush1.bf16.msra.mxu0 %v526
        %546 = vmatprep.subr.bf16.mxu0 0
        %547 = vmatpush1.bf16.msra.mxu0 %v527
        %548 = vmatprep.subr.bf16.mxu0 0
        %549 = vmatpush1.bf16.msra.mxu0 %v528
        %550 = vmatprep.subr.bf16.mxu0 0
        %551 = vmatpush1.bf16.msra.mxu0 %v529
        %552 = vmatprep.subr.bf16.mxu0 0
        %553 = vmatpush1.bf16.msra.mxu0 %v530
        %554 = vmatprep.subr.bf16.mxu0 0
        %555 = vmatpush1.bf16.msra.mxu0 %v531
        %556 = vmatprep.subr.bf16.mxu0 0
        %557 = vmatpush1.bf16.msra.mxu0 0
        %558 = vmatprep.subr.bf16.mxu0 0
        %559 = vmatpush1.bf16.msra.mxu0 0
        %560 = vmatprep.subr.bf16.mxu0 0
        %561 = vmatpush1.bf16.msra.mxu0 0
        %562 = vmatprep.subr.bf16.mxu0 0
        %563 = vmatpush1.bf16.msra.mxu0 0
        %564 = vmatprep.subr.bf16.mxu0 0
        %565 = vmatpush1.bf16.msra.mxu0 0
        %566 = vmatprep.subr.bf16.mxu0 0
        %567 = vmatpush1.bf16.msra.mxu0 0
        %568 = vmatprep.subr.bf16.mxu0 0
        %569 = vmatpush1.bf16.msra.mxu0 0
        %570 = vmatprep.subr.bf16.mxu0 0
        %571 = vmatpush1.bf16.msra.mxu0 0
        %572 = vmatprep.mubr.bf16.mxu0 0
        %573 = vmatmul.mubr.bf16.gmra.mrb[0].mxu0 %v468
        %v574 = vpop.f32.mrb[0].mxu0
        %v575 = vadd.f32 %v490, %v574
        %v576 = vpop.f32.mrb[0].mxu0
        %v577 = vpop.f32.mrb[0].mxu0
        %v578 = vpop.f32.mrb[0].mxu0
        %579 = vdwg.mxu0
        %v580 = vsel %vm417, %v575, 0.0
        %581 = vadd.xlane.f32.xlu0 %v580
        %v582 = vpop.xlane.xlu0 %581
        %v583 = vrcp.pop 32.0
        %v584 = vmul.f32 %v582, %v583
        %v585 = vsub.f32 %v575, %v584
        %v586 = vmul.f32 %v585, %v585
        %v587 = vsel %vm417, %v586, 0.0
        %588 = vadd.xlane.f32.xlu0 %v587
        %v589 = vpop.xlane.xlu0 %588
        %v590 = vmul.f32 %v589, %v583
        %v591 = vadd.f32 %v590, 1e-05
        %v592 = vrsqrt.pop %v591
        %v593 = vmul.f32 %v585, %v592
        %v594 = vld [vmem:[%s7] sm:$0x1]
        %v596 = vlaneseq
        %v597 = vshrl.u32 %v596, 7
        %v598 = vsub.s32 0, %v597
        %v599 = vrot.slane %v594, %v598
        %v601 = vmul.f32 %v593, %v599
        %v602 = vld [vmem:[%s8] sm:$0x1]
        %v604 = vlaneseq
        %v605 = vshrl.u32 %v604, 7
        %v606 = vsub.s32 0, %v605
        %v607 = vrot.slane %v602, %v606
        %v609 = vadd.f32 %v601, %v607
        %610 = vst.msk [vmem:[%s366] sm:$0xff] %vm417, %v609
        %s611 = sand.u32 %s248, 1
        %s612 = scalar_lea.sflag [#allocation3], %s611
        %s613 = sand.u32 %s248, 1
        %s614 = smul.addr %s613, 8
        %s615 = scalar_lea.vmem [#allocation2], %s614
        // Predicated region
        $region57: #{denoised_forward.1} parent=55 // pred_check
          %p616 = pneg %p258
        $region58: #{denoised_forward.1} parent=55 // pred_check_branch
          %618 = sbr.rel (%p616) target = $region60
        $region59: #{denoised_forward.1} parent=55 // pred_region
          %s620 = ssub.s32 128, 128
          %621 = vsyncadd %s612, %s620
          %s622 = sadd.s32 %s28, %s27
          %s623 = smul.addr %s622, 128
          %s624 = scalar_lea.hbm %s9, %s623
          %s626 = sshll.u32 %s615, 4
          %s627 = int_to_ptr.vmem [resolvable:$true] %s626
          %629 = dma.vmem_to_hbm [thread:$0]  %s627, 128, %s624, %s612
        $region60: #{denoised_forward.1} parent=55 // pred_fallthru
          _
      $region56: #{denoised_forward.1} parent=5 // pred_fallthru
        _
      %p630 = scmp.le.s32.totalorder 2, %s18
      // Predicated region
      $region61: #{denoised_forward.1} parent=5 // pred_check
        %p631 = pneg %p630
      $region62: #{denoised_forward.1} parent=5 // pred_check_branch
        %633 = sbr.rel (%p631) target = $region64
      $region63: #{denoised_forward.1} parent=5 // pred_region
        %s634 = ssub.s32 %s18, 2
        // Predicated region
        $region65: #{denoised_forward.1} parent=63 // pred_check
          %p635 = pneg %p264
        $region66: #{denoised_forward.1} parent=63 // pred_check_branch
          %637 = sbr.rel (%p635) target = $region68
        $region67: #{denoised_forward.1} parent=63 // pred_region
          %s638 = sand.u32 %s249, 1
          %s639 = scalar_lea.sflag [#allocation3], %s638
          %s640 = sand.u32 %s249, 1
          %s641 = smul.addr %s640, 8
          %s642 = scalar_lea.vmem [#allocation2], %s641
          %643 = dma.done %s639, 128
        $region68: #{denoised_forward.1} parent=63 // pred_fallthru
          _
      $region64: #{denoised_forward.1} parent=5 // pred_fallthru
        _
    $region6: #{denoised_forward.1} parent=1 // loop_footer
      %s22 = sadd.s32 1, %s18
    $region7: #{denoised_forward.1} parent=1 // loop_footer_branch
      %17 = sbr.rel target = $region3
    $region8: #{denoised_forward.1} parent=1 // loop_exit
      _
    %644 = vsyncpa [#allocation3], 1
    %s645 = scalar_lea.sflag [#allocation3], 1
    %646 = vsyncpa %s645, 1

</llo_original>
